<compile_context>
chip_gen: v6e
topology: v6e:2x2x1
jax: 0.10.0
libtpu: 0.0.40
codegen_flags: <defaults>
</compile_context>

<pallas_src>
import functools

import numpy as np
import jax
import jax.numpy as jnp
from jax.experimental import pallas as pl
from jax.experimental.pallas import tpu as pltpu


# 3x3 tap offsets, row-major -- must match the wrapper's weight reshape order.
_OFFSETS = tuple((dy, dx) for dy in (-1, 0, 1) for dx in (-1, 0, 1))


def _res_block_kernel(x_ref, w1_ref, b1_ref, w2_ref, b2_ref, mask_ref, out_ref,
                      *, H, W, C, Cmid):
    """One batch element, channel-major / spatial-on-lanes.

    x_ref    : (1, C, H*W)       input image (channels on sublanes, pixels on lanes)
    w1_ref   : (Cmid, 9*C)       conv1 weights in im2col-matched layout
    b1_ref   : (Cmid, 1)
    w2_ref   : (C, 9*Cmid)       conv2 weights in im2col-matched layout
    b2_ref   : (C, 1)
    mask_ref : (9, H*W) float32  {0,1} validity mask per 3x3 tap (SAME padding)
    out_ref  : (1, C, H*W)
    """
    HW = H * W
    x = x_ref[0]                  # (C, HW)  -- lane-dense load
    masks = mask_ref[...]         # (9, HW)  -- read once, reused by both convs

    def im2col(a):
        # a: (Cin, HW) -> (9*Cin, HW); rows [tap*Cin : (tap+1)*Cin] hold `a`
        # shifted by that tap's (dy, dx) offset with zero fill off the image.
        # Shift = lane rotate on the XLU; boundary zeroing = one VPU multiply
        # with the precomputed tap mask (tap 0 needs neither).
        pieces = []
        for tap, (dy, dx) in enumerate(_OFFSETS):
            s = dy * W + dx
            if s == 0:
                pieces.append(a)
            else:
                # want shifted[p] = a[p + s]; roll(x, k)[i] = x[i - k]
                shifted = pltpu.roll(a, (-s) % HW, axis=1)   # XLU lane rotate
                pieces.append(shifted * masks[tap:tap + 1, :])
        return jnp.concatenate(pieces, axis=0)

    # ---- conv1 (3x3, SAME) as a single weight-stationary matmul + ReLU ----
    p1 = im2col(x)                                              # (9C, HW)
    h = jnp.dot(w1_ref[...], p1, preferred_element_type=jnp.float32)
    h = jnp.maximum(h + b1_ref[...], 0.0)                       # (Cmid, HW)

    # ---- conv2 (3x3, SAME) ----
    p2 = im2col(h)                                              # (9*Cmid, HW)
    y = jnp.dot(w2_ref[...], p2,
                preferred_element_type=jnp.float32) + b2_ref[...]   # (C, HW)

    # ---- residual / skip connection: x + block(x); lane-dense store ----
    out_ref[0] = (x + y).astype(out_ref.dtype)


def _make_tap_masks(H, W):
    """(9, H*W) float32 {0,1} masks: validity of each 3x3 tap under SAME pad."""
    ys = np.arange(H)[:, None]
    xs = np.arange(W)[None, :]
    masks = []
    for dy, dx in _OFFSETS:
        valid = ((ys + dy >= 0) & (ys + dy < H) &
                 (xs + dx >= 0) & (xs + dx < W))
        masks.append(valid.reshape(H * W))
    return np.stack(masks).astype(np.float32)


def res_model_forward(x_nchw, w1, b1, w2, b2):
    """ResModel forward.  x_nchw: (N, C, H, W) float32.  Returns (N, C, H, W)."""
    N, C, H, W = x_nchw.shape
    Cmid = w1.shape[-1]
    HW = H * W
    assert w1.shape == (3, 3, C, Cmid)
    assert w2.shape == (3, 3, Cmid, C)

    # Free layout change: NCHW flattens directly into (N, C, H*W); spatial
    # becomes the lane axis inside the kernel.  No transpose, no pad in HBM.
    x_flat = x_nchw.reshape(N, C, HW)

    # Tiny weight/bias reshapes (negligible), im2col-matched weight-stationary
    # form: row index of the contraction is tap*Cin + cin, matching _OFFSETS.
    w1r = jnp.transpose(w1.reshape(9 * C, Cmid))     # (Cmid, 9C)
    w2r = jnp.transpose(w2.reshape(9 * Cmid, C))     # (C, 9Cmid)
    b1c = b1.reshape(Cmid, 1)
    b2c = b2.reshape(C, 1)
    masks = jnp.asarray(_make_tap_masks(H, W))       # (9, HW)

    kernel = functools.partial(_res_block_kernel, H=H, W=W, C=C, Cmid=Cmid)

    # Advisory cost hint: two 3x3 convs (2*M*K*N flops each) + residual adds.
    flops = int(2 * N * HW * (Cmid * 9 * C + C * 9 * Cmid) + N * C * HW)
    bytes_accessed = int(4 * (2 * N * C * HW            # x in, out
                              + Cmid * 9 * C + Cmid     # w1, b1
                              + C * 9 * Cmid + C        # w2, b2
                              + 9 * HW))                # tap masks
    cost = pl.CostEstimate(flops=flops, transcendentals=0,
                           bytes_accessed=bytes_accessed)

    out_flat = pl.pallas_call(
        kernel,
        out_shape=jax.ShapeDtypeStruct((N, C, HW), x_nchw.dtype),
        grid_spec=pltpu.PrefetchScalarGridSpec(
            num_scalar_prefetch=0,
            grid=(N,),
            in_specs=[
                pl.BlockSpec((1, C, HW), lambda n: (n, 0, 0)),
                # Constant index_maps: weights / biases / masks stay VMEM-resident
                # across grid steps (no per-step re-DMA).
                pl.BlockSpec((Cmid, 9 * C), lambda n: (0, 0)),
                pl.BlockSpec((Cmid, 1), lambda n: (0, 0)),
                pl.BlockSpec((C, 9 * Cmid), lambda n: (0, 0)),
                pl.BlockSpec((C, 1), lambda n: (0, 0)),
                pl.BlockSpec((9, HW), lambda n: (0, 0)),
            ],
            out_specs=pl.BlockSpec((1, C, HW), lambda n: (n, 0, 0)),
        ),
        compiler_params=pltpu.CompilerParams(
            dimension_semantics=("parallel",)),   # batch splits across TCs (v7x)
        cost_estimate=cost,
    )(x_flat, w1r, b1c, w2r, b2c, masks)

    # Free reshape back to the PyTorch NCHW convention.
    return out_flat.reshape(N, C, H, W)


def _reference_forward(x_nchw, w1, b1, w2, b2):
    """Pure-JAX reference (lax conv) for correctness check."""
    x = jnp.transpose(x_nchw, (0, 2, 3, 1))  # NHWC
    dn = jax.lax.conv_dimension_numbers(x.shape, w1.shape,
                                        ("NHWC", "HWIO", "NHWC"))
    h = jax.lax.conv_general_dilated(x, w1, (1, 1), "SAME",
                                     dimension_numbers=dn) + b1
    h = jnp.maximum(h, 0.0)
    y = jax.lax.conv_general_dilated(h, w2, (1, 1), "SAME",
                                     dimension_numbers=dn) + b2
    out = x + y  # skip connection
    return jnp.transpose(out, (0, 3, 1, 2))


if __name__ == "__main__":
    N, C, H, W = 2, 4, 16, 16
    Cmid = 8

    key = jax.random.PRNGKey(0)
    kx, kw1, kb1, kw2, kb2 = jax.random.split(key, 5)
    x = jax.random.normal(kx, (N, C, H, W), jnp.float32)
    w1 = jax.random.normal(kw1, (3, 3, C, Cmid), jnp.float32) * 0.1
    b1 = jax.random.normal(kb1, (Cmid,), jnp.float32) * 0.1
    w2 = jax.random.normal(kw2, (3, 3, Cmid, C), jnp.float32) * 0.1
    b2 = jax.random.normal(kb2, (C,), jnp.float32) * 0.1

    out = jax.block_until_ready(res_model_forward(x, w1, b1, w2, b2))
    ref = jax.block_until_ready(_reference_forward(x, w1, b1, w2, b2))

    assert out.shape == (N, C, H, W)
    assert jnp.allclose(out, ref, atol=1e-4, rtol=1e-4)
    print("KERNEL_OK")
</pallas_src>

<mosaic_0001>
module attributes {stable_mosaic.version = 11 : i64} {
  func.func @_res_block_kernel(%arg0: i32, %arg1: memref<1x4x256xf32, #tpu.memory_space<vmem>>, %arg2: memref<8x36xf32, #tpu.memory_space<vmem>>, %arg3: memref<8x1xf32, #tpu.memory_space<vmem>>, %arg4: memref<4x72xf32, #tpu.memory_space<vmem>>, %arg5: memref<4x1xf32, #tpu.memory_space<vmem>>, %arg6: memref<9x256xf32, #tpu.memory_space<vmem>>, %arg7: memref<1x4x256xf32, #tpu.memory_space<vmem>>) attributes {dimension_semantics = [#tpu.dimension_semantics<parallel>], iteration_bounds = array<i64: 2>, scalar_prefetch = 0 : i64, scratch_operands = 0 : i64, tpu.core_type = #tpu.core_type<tc>, window_params = [{transform_indices = @transform_0, window_bounds = array<i64: 1, 4, 256>}, {pipeline_mode = #tpu.pipeline_mode<synchronous>, transform_indices = @transform_1, window_bounds = array<i64: 8, 36>}, {pipeline_mode = #tpu.pipeline_mode<synchronous>, transform_indices = @transform_2, window_bounds = array<i64: 8, 1>}, {pipeline_mode = #tpu.pipeline_mode<synchronous>, transform_indices = @transform_3, window_bounds = array<i64: 4, 72>}, {pipeline_mode = #tpu.pipeline_mode<synchronous>, transform_indices = @transform_4, window_bounds = array<i64: 4, 1>}, {pipeline_mode = #tpu.pipeline_mode<synchronous>, transform_indices = @transform_5, window_bounds = array<i64: 9, 256>}, {transform_indices = @transform_6, window_bounds = array<i64: 1, 4, 256>}]} {
    %c0 = arith.constant 0 : index
    %c0_0 = arith.constant 0 : index
    %c0_1 = arith.constant 0 : index
    %0 = vector.load %arg1[%c0, %c0_0, %c0_1] : memref<1x4x256xf32, #tpu.memory_space<vmem>>, vector<1x4x256xf32>
    %1 = vector.shape_cast %0 : vector<1x4x256xf32> to vector<4x256xf32>
    %c0_2 = arith.constant 0 : index
    %c0_3 = arith.constant 0 : index
    %2 = vector.load %arg6[%c0_2, %c0_3] : memref<9x256xf32, #tpu.memory_space<vmem>>, vector<9x256xf32>
    %c17_i32 = arith.constant 17 : i32
    %3 = tpu.dynamic_rotate %1 by %c17_i32 dim 1 : vector<4x256xf32>, i32 -> vector<4x256xf32>
    %4 = vector.extract_strided_slice %2 {offsets = [0, 0], sizes = [1, 256], strides = [1, 1]} : vector<9x256xf32> to vector<1x256xf32>
    %5 = vector.broadcast %4 : vector<1x256xf32> to vector<4x256xf32>
    %6 = arith.mulf %3, %5 : vector<4x256xf32>
    %c16_i32 = arith.constant 16 : i32
    %7 = tpu.dynamic_rotate %1 by %c16_i32 dim 1 : vector<4x256xf32>, i32 -> vector<4x256xf32>
    %8 = vector.extract_strided_slice %2 {offsets = [1, 0], sizes = [1, 256], strides = [1, 1]} : vector<9x256xf32> to vector<1x256xf32>
    %9 = vector.broadcast %8 : vector<1x256xf32> to vector<4x256xf32>
    %10 = arith.mulf %7, %9 : vector<4x256xf32>
    %c15_i32 = arith.constant 15 : i32
    %11 = tpu.dynamic_rotate %1 by %c15_i32 dim 1 : vector<4x256xf32>, i32 -> vector<4x256xf32>
    %12 = vector.extract_strided_slice %2 {offsets = [2, 0], sizes = [1, 256], strides = [1, 1]} : vector<9x256xf32> to vector<1x256xf32>
    %13 = vector.broadcast %12 : vector<1x256xf32> to vector<4x256xf32>
    %14 = arith.mulf %11, %13 : vector<4x256xf32>
    %c1_i32 = arith.constant 1 : i32
    %15 = tpu.dynamic_rotate %1 by %c1_i32 dim 1 : vector<4x256xf32>, i32 -> vector<4x256xf32>
    %16 = vector.extract_strided_slice %2 {offsets = [3, 0], sizes = [1, 256], strides = [1, 1]} : vector<9x256xf32> to vector<1x256xf32>
    %17 = vector.broadcast %16 : vector<1x256xf32> to vector<4x256xf32>
    %18 = arith.mulf %15, %17 : vector<4x256xf32>
    %c255_i32 = arith.constant 255 : i32
    %19 = tpu.dynamic_rotate %1 by %c255_i32 dim 1 : vector<4x256xf32>, i32 -> vector<4x256xf32>
    %20 = vector.extract_strided_slice %2 {offsets = [5, 0], sizes = [1, 256], strides = [1, 1]} : vector<9x256xf32> to vector<1x256xf32>
    %21 = vector.broadcast %20 : vector<1x256xf32> to vector<4x256xf32>
    %22 = arith.mulf %19, %21 : vector<4x256xf32>
    %c241_i32 = arith.constant 241 : i32
    %23 = tpu.dynamic_rotate %1 by %c241_i32 dim 1 : vector<4x256xf32>, i32 -> vector<4x256xf32>
    %24 = vector.extract_strided_slice %2 {offsets = [6, 0], sizes = [1, 256], strides = [1, 1]} : vector<9x256xf32> to vector<1x256xf32>
    %25 = vector.broadcast %24 : vector<1x256xf32> to vector<4x256xf32>
    %26 = arith.mulf %23, %25 : vector<4x256xf32>
    %c240_i32 = arith.constant 240 : i32
    %27 = tpu.dynamic_rotate %1 by %c240_i32 dim 1 : vector<4x256xf32>, i32 -> vector<4x256xf32>
    %28 = vector.extract_strided_slice %2 {offsets = [7, 0], sizes = [1, 256], strides = [1, 1]} : vector<9x256xf32> to vector<1x256xf32>
    %29 = vector.broadcast %28 : vector<1x256xf32> to vector<4x256xf32>
    %30 = arith.mulf %27, %29 : vector<4x256xf32>
    %c239_i32 = arith.constant 239 : i32
    %31 = tpu.dynamic_rotate %1 by %c239_i32 dim 1 : vector<4x256xf32>, i32 -> vector<4x256xf32>
    %32 = vector.extract_strided_slice %2 {offsets = [8, 0], sizes = [1, 256], strides = [1, 1]} : vector<9x256xf32> to vector<1x256xf32>
    %33 = vector.broadcast %32 : vector<1x256xf32> to vector<4x256xf32>
    %34 = arith.mulf %31, %33 : vector<4x256xf32>
    %35 = tpu.concatenate %6, %10, %14, %18, %1, %22, %26, %30, %34 in 0 : vector<4x256xf32>, vector<4x256xf32>, vector<4x256xf32>, vector<4x256xf32>, vector<4x256xf32>, vector<4x256xf32>, vector<4x256xf32>, vector<4x256xf32>, vector<4x256xf32> -> vector<36x256xf32>
    %c0_4 = arith.constant 0 : index
    %c0_5 = arith.constant 0 : index
    %36 = vector.load %arg2[%c0_4, %c0_5] : memref<8x36xf32, #tpu.memory_space<vmem>>, vector<8x36xf32>
    %cst = arith.constant dense<0.000000e+00> : vector<8x256xf32>
    %37 = tpu.matmul %36, %35, %cst {dimension_numbers = #tpu.dot_dimension_numbers<[1], [0], [0], [1], [0, 0, 1, 1], [], []>} : vector<8x36xf32>, vector<36x256xf32>, vector<8x256xf32> -> vector<8x256xf32>
    %c0_6 = arith.constant 0 : index
    %c0_7 = arith.constant 0 : index
    %38 = vector.load %arg3[%c0_6, %c0_7] : memref<8x1xf32, #tpu.memory_space<vmem>>, vector<8x1xf32>
    %39 = vector.broadcast %38 : vector<8x1xf32> to vector<8x256xf32>
    %40 = arith.addf %37, %39 : vector<8x256xf32>
    %cst_8 = arith.constant 0.000000e+00 : f32
    %41 = vector.broadcast %cst_8 : f32 to vector<8x256xf32>
    %42 = arith.maximumf %40, %41 : vector<8x256xf32>
    %c17_i32_9 = arith.constant 17 : i32
    %43 = tpu.dynamic_rotate %42 by %c17_i32_9 dim 1 : vector<8x256xf32>, i32 -> vector<8x256xf32>
    %44 = vector.extract_strided_slice %2 {offsets = [0, 0], sizes = [1, 256], strides = [1, 1]} : vector<9x256xf32> to vector<1x256xf32>
    %45 = vector.broadcast %44 : vector<1x256xf32> to vector<8x256xf32>
    %46 = arith.mulf %43, %45 : vector<8x256xf32>
    %c16_i32_10 = arith.constant 16 : i32
    %47 = tpu.dynamic_rotate %42 by %c16_i32_10 dim 1 : vector<8x256xf32>, i32 -> vector<8x256xf32>
    %48 = vector.extract_strided_slice %2 {offsets = [1, 0], sizes = [1, 256], strides = [1, 1]} : vector<9x256xf32> to vector<1x256xf32>
    %49 = vector.broadcast %48 : vector<1x256xf32> to vector<8x256xf32>
    %50 = arith.mulf %47, %49 : vector<8x256xf32>
    %c15_i32_11 = arith.constant 15 : i32
    %51 = tpu.dynamic_rotate %42 by %c15_i32_11 dim 1 : vector<8x256xf32>, i32 -> vector<8x256xf32>
    %52 = vector.extract_strided_slice %2 {offsets = [2, 0], sizes = [1, 256], strides = [1, 1]} : vector<9x256xf32> to vector<1x256xf32>
    %53 = vector.broadcast %52 : vector<1x256xf32> to vector<8x256xf32>
    %54 = arith.mulf %51, %53 : vector<8x256xf32>
    %c1_i32_12 = arith.constant 1 : i32
    %55 = tpu.dynamic_rotate %42 by %c1_i32_12 dim 1 : vector<8x256xf32>, i32 -> vector<8x256xf32>
    %56 = vector.extract_strided_slice %2 {offsets = [3, 0], sizes = [1, 256], strides = [1, 1]} : vector<9x256xf32> to vector<1x256xf32>
    %57 = vector.broadcast %56 : vector<1x256xf32> to vector<8x256xf32>
    %58 = arith.mulf %55, %57 : vector<8x256xf32>
    %c255_i32_13 = arith.constant 255 : i32
    %59 = tpu.dynamic_rotate %42 by %c255_i32_13 dim 1 : vector<8x256xf32>, i32 -> vector<8x256xf32>
    %60 = vector.extract_strided_slice %2 {offsets = [5, 0], sizes = [1, 256], strides = [1, 1]} : vector<9x256xf32> to vector<1x256xf32>
    %61 = vector.broadcast %60 : vector<1x256xf32> to vector<8x256xf32>
    %62 = arith.mulf %59, %61 : vector<8x256xf32>
    %c241_i32_14 = arith.constant 241 : i32
    %63 = tpu.dynamic_rotate %42 by %c241_i32_14 dim 1 : vector<8x256xf32>, i32 -> vector<8x256xf32>
    %64 = vector.extract_strided_slice %2 {offsets = [6, 0], sizes = [1, 256], strides = [1, 1]} : vector<9x256xf32> to vector<1x256xf32>
    %65 = vector.broadcast %64 : vector<1x256xf32> to vector<8x256xf32>
    %66 = arith.mulf %63, %65 : vector<8x256xf32>
    %c240_i32_15 = arith.constant 240 : i32
    %67 = tpu.dynamic_rotate %42 by %c240_i32_15 dim 1 : vector<8x256xf32>, i32 -> vector<8x256xf32>
    %68 = vector.extract_strided_slice %2 {offsets = [7, 0], sizes = [1, 256], strides = [1, 1]} : vector<9x256xf32> to vector<1x256xf32>
    %69 = vector.broadcast %68 : vector<1x256xf32> to vector<8x256xf32>
    %70 = arith.mulf %67, %69 : vector<8x256xf32>
    %c239_i32_16 = arith.constant 239 : i32
    %71 = tpu.dynamic_rotate %42 by %c239_i32_16 dim 1 : vector<8x256xf32>, i32 -> vector<8x256xf32>
    %72 = vector.extract_strided_slice %2 {offsets = [8, 0], sizes = [1, 256], strides = [1, 1]} : vector<9x256xf32> to vector<1x256xf32>
    %73 = vector.broadcast %72 : vector<1x256xf32> to vector<8x256xf32>
    %74 = arith.mulf %71, %73 : vector<8x256xf32>
    %75 = tpu.concatenate %46, %50, %54, %58, %42, %62, %66, %70, %74 in 0 : vector<8x256xf32>, vector<8x256xf32>, vector<8x256xf32>, vector<8x256xf32>, vector<8x256xf32>, vector<8x256xf32>, vector<8x256xf32>, vector<8x256xf32>, vector<8x256xf32> -> vector<72x256xf32>
    %c0_17 = arith.constant 0 : index
    %c0_18 = arith.constant 0 : index
    %76 = vector.load %arg4[%c0_17, %c0_18] : memref<4x72xf32, #tpu.memory_space<vmem>>, vector<4x72xf32>
    %cst_19 = arith.constant dense<0.000000e+00> : vector<4x256xf32>
    %77 = tpu.matmul %76, %75, %cst_19 {dimension_numbers = #tpu.dot_dimension_numbers<[1], [0], [0], [1], [0, 0, 1, 1], [], []>} : vector<4x72xf32>, vector<72x256xf32>, vector<4x256xf32> -> vector<4x256xf32>
    %c0_20 = arith.constant 0 : index
    %c0_21 = arith.constant 0 : index
    %78 = vector.load %arg5[%c0_20, %c0_21] : memref<4x1xf32, #tpu.memory_space<vmem>>, vector<4x1xf32>
    %79 = vector.broadcast %78 : vector<4x1xf32> to vector<4x256xf32>
    %80 = arith.addf %77, %79 : vector<4x256xf32>
    %81 = arith.addf %1, %80 : vector<4x256xf32>
    %c0_22 = arith.constant 0 : index
    %c0_23 = arith.constant 0 : index
    %c0_24 = arith.constant 0 : index
    %82 = vector.load %arg7[%c0_22, %c0_23, %c0_24] : memref<1x4x256xf32, #tpu.memory_space<vmem>>, vector<1x4x256xf32>
    %83 = vector.shape_cast %82 : vector<1x4x256xf32> to vector<4x256xf32>
    %84 = vector.shape_cast %81 : vector<4x256xf32> to vector<1x4x256xf32>
    tpu.vector_store %arg7[%c0_22, %c0_23, %c0_24], %84 {strides = array<i32>} : memref<1x4x256xf32, #tpu.memory_space<vmem>>, vector<1x4x256xf32>,
    return
  }
  func.func @transform_0(%arg0: i32) -> (i32, i32, i32) {
    %c0_i32 = arith.constant 0 : i32
    %c0_i32_0 = arith.constant 0 : i32
    %c0_i32_1 = arith.constant 0 : i32
    return %arg0, %c0_i32, %c0_i32_0 : i32, i32, i32
  }
  func.func @transform_1(%arg0: i32) -> (i32, i32) {
    %c0_i32 = arith.constant 0 : i32
    %c0_i32_0 = arith.constant 0 : i32
    %c0_i32_1 = arith.constant 0 : i32
    return %c0_i32, %c0_i32_0 : i32, i32
  }
  func.func @transform_2(%arg0: i32) -> (i32, i32) {
    %c0_i32 = arith.constant 0 : i32
    %c0_i32_0 = arith.constant 0 : i32
    %c0_i32_1 = arith.constant 0 : i32
    return %c0_i32, %c0_i32_0 : i32, i32
  }
  func.func @transform_3(%arg0: i32) -> (i32, i32) {
    %c0_i32 = arith.constant 0 : i32
    %c0_i32_0 = arith.constant 0 : i32
    %c0_i32_1 = arith.constant 0 : i32
    return %c0_i32, %c0_i32_0 : i32, i32
  }
  func.func @transform_4(%arg0: i32) -> (i32, i32) {
    %c0_i32 = arith.constant 0 : i32
    %c0_i32_0 = arith.constant 0 : i32
    %c0_i32_1 = arith.constant 0 : i32
    return %c0_i32, %c0_i32_0 : i32, i32
  }
  func.func @transform_5(%arg0: i32) -> (i32, i32) {
    %c0_i32 = arith.constant 0 : i32
    %c0_i32_0 = arith.constant 0 : i32
    %c0_i32_1 = arith.constant 0 : i32
    return %c0_i32, %c0_i32_0 : i32, i32
  }
  func.func @transform_6(%arg0: i32) -> (i32, i32, i32) {
    %c0_i32 = arith.constant 0 : i32
    %c0_i32_0 = arith.constant 0 : i32
    %c0_i32_1 = arith.constant 0 : i32
    return %arg0, %c0_i32, %c0_i32_0 : i32, i32, i32
  }
}

</mosaic_0001>

<llo_original>
// kernel: tpu_custom_call.1
$region0: #{tpu_custom_call.1}
  #allocation0 [shape = 'u32[]', space=smem, size = 0x4, offset = 0x4, fixed_abs, tag = 'smem constant byte address 0x4 - core index']
  #allocation1 [shape = 'u32[144,128]{1,0:T(1,128)}', space=vmem, size = 0x12000, scoped, tag = 'internal scratch']
  %s0 = inlined_call_operand.hbm [shape: f32[2,4,256], index: 0, kind: input, shape index: {}]
  %s1 = inlined_call_operand.vmem [shape: f32[8,36], index: 1, kind: input, shape index: {}]
  %s2 = inlined_call_operand.vmem [shape: f32[8,1], index: 2, kind: input, shape index: {}]
  %s3 = inlined_call_operand.vmem [shape: f32[4,72], index: 3, kind: input, shape index: {}]
  %s4 = inlined_call_operand.vmem [shape: f32[4,1], index: 4, kind: input, shape index: {}]
  %s5 = inlined_call_operand.hbm [shape: f32[9,256], index: 5, kind: input, shape index: {}]
  %s6 = inlined_call_operand.hbm [shape: f32[2,4,256], index: 6, kind: output, shape index: {}]
  %s7 = sld [smem:[#allocation0]]
  $region65: #{tpu_custom_call.1} parent=0
    _
  %s9 = ssub.s32 1, %s7
  %s10 = scalar_select 0, %s9, %s7
  $region1: #{tpu_custom_call.1} parent=0
    #allocation2 [shape = 'u8[8192]{0}', space=vmem, size = 0x2000, scoped, tag = 'input window, operand 0']
    #allocation3 [shape = 's32[2]{0}', space=sflag, size = 0x8, scoped, tag = 'scoped memory for tpu_custom_call.1']
    #allocation4 [shape = 's32[2]{0}', space=sflag, size = 0x8, scoped, tag = 'scoped memory for tpu_custom_call.1']
    #allocation5 [shape = 'u8[16384]{0}', space=vmem, size = 0x4000, scoped, tag = 'input window, operand 5, single buffered']
    #allocation6 [shape = 's32[1]{0}', space=sflag, size = 0x4, scoped, tag = 'scoped memory for tpu_custom_call.1']
    #allocation7 [shape = 'u8[8192]{0}', space=vmem, size = 0x2000, scoped, tag = 'output window, operand 0']
    %11 = vsyncpa [#allocation3], 0
    %s12 = scalar_lea.sflag [#allocation3], 1
    %13 = vsyncpa %s12, 0
    %14 = vsyncpa [#allocation6], 0
    %15 = vsyncpa [#allocation4], 0
    %s16 = scalar_lea.sflag [#allocation4], 1
    %17 = vsyncpa %s16, 0
    loop: start=0, step=1, limit=4
    $region2: #{tpu_custom_call.1} parent=1 // loop_pre_header
      _
    $region3: #{tpu_custom_call.1} parent=1 // loop_header
      %s19 = sphi 0, %s23
      %p20 = scmp.ge.s32.totalorder %s19, 4
      %s29 = sphi 0, %s31
      %s32 = sphi 0, %s29
      %s33 = sphi 0, %s32
      %s49 = sphi 0, %s33
      %s53 = sphi 0, %s53
      %s55 = sphi 0, %s53
      %s56 = sphi 0, %s55
      %s70 = sphi 0, %s56
      %s74 = sphi 0, %s74
      %s76 = sphi 0, %s74
      %s77 = sphi 0, %s76
      %s91 = sphi 0, %s77
      %s95 = sphi 0, %s95
      %s97 = sphi 0, %s95
      %s98 = sphi 0, %s97
      %s112 = sphi 0, %s98
      %s116 = sphi 0, %s116
      %s118 = sphi 0, %s116
      %s119 = sphi 0, %s118
      %s133 = sphi 0, %s119
      %s137 = sphi 0, %s137
      %s139 = sphi 0, %s137
      %s140 = sphi 0, %s139
      %s154 = sphi 0, %s140
      %s160 = sphi 0, %s162
      %s163 = sphi 0, %s160
      %s164 = sphi 0, %s163
      %s180 = sphi 0, %s164
    $region4: #{tpu_custom_call.1} parent=1 // loop_header_branch
      %22 = sbr.rel (%p20) target = $region8
    $region5: #{tpu_custom_call.1} parent=1 // loop_body
      %s24 = ssub.s32 %s19, 1
      %s25 = ssub.s32 %s19, 2
      %s26 = sadd.s32 %s19, 1
      %s27 = ssub.s32 %s19, %s26
      %p28 = scmp.eq.s32.totalorder %s27, 0
      %s30 = sadd.s32 %s29, 1
      %s31 = scalar_select %p28, %s29, %s30
      %p34 = pneg %p28
      %p35 = scmp.eq.s32.totalorder %s19, 1
      %p36 = por %p34, %p35
      %p37 = scmp.ne.s32.totalorder %s29, %s32
      %p38 = scmp.eq.s32.totalorder %s19, 0
      %p39 = por %p37, %p38
      %p40 = scmp.ne.s32.totalorder %s29, %s32
      %p41 = scmp.eq.s32.totalorder %s24, 1
      %p42 = por %p40, %p41
      %p43 = scmp.ne.s32.totalorder %s32, %s33
      %p44 = scmp.eq.s32.totalorder %s24, 0
      %p45 = por %p43, %p44
      %p46 = scmp.ne.s32.totalorder %s32, %s33
      %p47 = scmp.eq.s32.totalorder %s25, 1
      %p48 = por %p46, %p47
      %p50 = scmp.ne.s32.totalorder %s33, %s49
      %p51 = scmp.eq.s32.totalorder %s25, 0
      %p52 = por %p50, %p51
      %s54 = sadd.s32 %s53, 1
      %p57 = scmp.eq.s32.totalorder %s19, 1
      %p58 = scmp.ne.s32.totalorder %s53, %s55
      %p59 = scmp.eq.s32.totalorder %s19, 0
      %p60 = por %p58, %p59
      %p61 = scmp.ne.s32.totalorder %s53, %s55
      %p62 = scmp.eq.s32.totalorder %s24, 1
      %p63 = por %p61, %p62
      %p64 = scmp.ne.s32.totalorder %s55, %s56
      %p65 = scmp.eq.s32.totalorder %s24, 0
      %p66 = por %p64, %p65
      %p67 = scmp.ne.s32.totalorder %s55, %s56
      %p68 = scmp.eq.s32.totalorder %s25, 1
      %p69 = por %p67, %p68
      %p71 = scmp.ne.s32.totalorder %s56, %s70
      %p72 = scmp.eq.s32.totalorder %s25, 0
      %p73 = por %p71, %p72
      %s75 = sadd.s32 %s74, 1
      %p78 = scmp.eq.s32.totalorder %s19, 1
      %p79 = scmp.ne.s32.totalorder %s74, %s76
      %p80 = scmp.eq.s32.totalorder %s19, 0
      %p81 = por %p79, %p80
      %p82 = scmp.ne.s32.totalorder %s74, %s76
      %p83 = scmp.eq.s32.totalorder %s24, 1
      %p84 = por %p82, %p83
      %p85 = scmp.ne.s32.totalorder %s76, %s77
      %p86 = scmp.eq.s32.totalorder %s24, 0
      %p87 = por %p85, %p86
      %p88 = scmp.ne.s32.totalorder %s76, %s77
      %p89 = scmp.eq.s32.totalorder %s25, 1
      %p90 = por %p88, %p89
      %p92 = scmp.ne.s32.totalorder %s77, %s91
      %p93 = scmp.eq.s32.totalorder %s25, 0
      %p94 = por %p92, %p93
      %s96 = sadd.s32 %s95, 1
      %p99 = scmp.eq.s32.totalorder %s19, 1
      %p100 = scmp.ne.s32.totalorder %s95, %s97
      %p101 = scmp.eq.s32.totalorder %s19, 0
      %p102 = por %p100, %p101
      %p103 = scmp.ne.s32.totalorder %s95, %s97
      %p104 = scmp.eq.s32.totalorder %s24, 1
      %p105 = por %p103, %p104
      %p106 = scmp.ne.s32.totalorder %s97, %s98
      %p107 = scmp.eq.s32.totalorder %s24, 0
      %p108 = por %p106, %p107
      %p109 = scmp.ne.s32.totalorder %s97, %s98
      %p110 = scmp.eq.s32.totalorder %s25, 1
      %p111 = por %p109, %p110
      %p113 = scmp.ne.s32.totalorder %s98, %s112
      %p114 = scmp.eq.s32.totalorder %s25, 0
      %p115 = por %p113, %p114
      %s117 = sadd.s32 %s116, 1
      %p120 = scmp.eq.s32.totalorder %s19, 1
      %p121 = scmp.ne.s32.totalorder %s116, %s118
      %p122 = scmp.eq.s32.totalorder %s19, 0
      %p123 = por %p121, %p122
      %p124 = scmp.ne.s32.totalorder %s116, %s118
      %p125 = scmp.eq.s32.totalorder %s24, 1
      %p126 = por %p124, %p125
      %p127 = scmp.ne.s32.totalorder %s118, %s119
      %p128 = scmp.eq.s32.totalorder %s24, 0
      %p129 = por %p127, %p128
      %p130 = scmp.ne.s32.totalorder %s118, %s119
      %p131 = scmp.eq.s32.totalorder %s25, 1
      %p132 = por %p130, %p131
      %p134 = scmp.ne.s32.totalorder %s119, %s133
      %p135 = scmp.eq.s32.totalorder %s25, 0
      %p136 = por %p134, %p135
      %s138 = sadd.s32 %s137, 1
      %p141 = scmp.eq.s32.totalorder %s19, 1
      %p142 = scmp.ne.s32.totalorder %s137, %s139
      %p143 = scmp.eq.s32.totalorder %s19, 0
      %p144 = por %p142, %p143
      %p145 = scmp.ne.s32.totalorder %s137, %s139
      %p146 = scmp.eq.s32.totalorder %s24, 1
      %p147 = por %p145, %p146
      %p148 = scmp.ne.s32.totalorder %s139, %s140
      %p149 = scmp.eq.s32.totalorder %s24, 0
      %p150 = por %p148, %p149
      %p151 = scmp.ne.s32.totalorder %s139, %s140
      %p152 = scmp.eq.s32.totalorder %s25, 1
      %p153 = por %p151, %p152
      %p155 = scmp.ne.s32.totalorder %s140, %s154
      %p156 = scmp.eq.s32.totalorder %s25, 0
      %p157 = por %p155, %p156
      %s158 = ssub.s32 %s19, %s26
      %p159 = scmp.eq.s32.totalorder %s158, 0
      %s161 = sadd.s32 %s160, 1
      %s162 = scalar_select %p159, %s160, %s161
      %p165 = pneg %p159
      %p166 = scmp.eq.s32.totalorder %s19, 1
      %p167 = por %p165, %p166
      %p168 = scmp.ne.s32.totalorder %s160, %s163
      %p169 = scmp.eq.s32.totalorder %s19, 0
      %p170 = por %p168, %p169
      %p171 = scmp.ne.s32.totalorder %s160, %s163
      %p172 = scmp.eq.s32.totalorder %s24, 1
      %p173 = por %p171, %p172
      %p174 = scmp.ne.s32.totalorder %s163, %s164
      %p175 = scmp.eq.s32.totalorder %s24, 0
      %p176 = por %p174, %p175
      %p177 = scmp.ne.s32.totalorder %s163, %s164
      %p178 = scmp.eq.s32.totalorder %s25, 1
      %p179 = por %p177, %p178
      %p181 = scmp.ne.s32.totalorder %s164, %s180
      %p182 = scmp.eq.s32.totalorder %s25, 0
      %p183 = por %p181, %p182
      %p184 = scmp.le.s32.totalorder 1, %s19
      %p185 = scmp.lt.s32.totalorder %s19, 3
      %p186 = pnand %p184, %p185
      %p187 = pneg %p186
      // Predicated region
      $region9: #{tpu_custom_call.1} parent=5 // pred_check
        _
      $region10: #{tpu_custom_call.1} parent=5 // pred_check_branch
        %189 = sbr.rel (%p186) target = $region12
      $region11: #{tpu_custom_call.1} parent=5 // pred_region
        %s190 = ssub.s32 %s19, 1
        // Predicated region
        $region13: #{tpu_custom_call.1} parent=11 // pred_check
          %p191 = pneg %p66
        $region14: #{tpu_custom_call.1} parent=11 // pred_check_branch
          %193 = sbr.rel (%p191) target = $region16
        $region15: #{tpu_custom_call.1} parent=11 // pred_region
          _
        $region16: #{tpu_custom_call.1} parent=11 // pred_fallthru
          _
        // Predicated region
        $region17: #{tpu_custom_call.1} parent=11 // pred_check
          %p194 = pneg %p87
        $region18: #{tpu_custom_call.1} parent=11 // pred_check_branch
          %196 = sbr.rel (%p194) target = $region20
        $region19: #{tpu_custom_call.1} parent=11 // pred_region
          _
        $region20: #{tpu_custom_call.1} parent=11 // pred_fallthru
          _
        // Predicated region
        $region21: #{tpu_custom_call.1} parent=11 // pred_check
          %p197 = pneg %p108
        $region22: #{tpu_custom_call.1} parent=11 // pred_check_branch
          %199 = sbr.rel (%p197) target = $region24
        $region23: #{tpu_custom_call.1} parent=11 // pred_region
          _
        $region24: #{tpu_custom_call.1} parent=11 // pred_fallthru
          _
        // Predicated region
        $region25: #{tpu_custom_call.1} parent=11 // pred_check
          %p200 = pneg %p129
        $region26: #{tpu_custom_call.1} parent=11 // pred_check_branch
          %202 = sbr.rel (%p200) target = $region28
        $region27: #{tpu_custom_call.1} parent=11 // pred_region
          _
        $region28: #{tpu_custom_call.1} parent=11 // pred_fallthru
          _
        // Predicated region
        $region29: #{tpu_custom_call.1} parent=11 // pred_check
          %p203 = pneg %p150
        $region30: #{tpu_custom_call.1} parent=11 // pred_check_branch
          %205 = sbr.rel (%p203) target = $region32
        $region31: #{tpu_custom_call.1} parent=11 // pred_region
          %s207 = ssub.s32 512, 512
          %208 = vsyncadd [#allocation6], %s207
          %s209 = sshll.u32 [#allocation5], 4
          %s210 = int_to_ptr.vmem [resolvable:$true] %s209
          %215 = dma.hbm_to_vmem [thread:$0]  %s5, 512, %s210, [#allocation6], 256, 256, 16
        $region32: #{tpu_custom_call.1} parent=11 // pred_fallthru
          _
      $region12: #{tpu_custom_call.1} parent=5 // pred_fallthru
        _
      %p216 = scmp.lt.s32.totalorder %s19, 2
      // Predicated region
      $region33: #{tpu_custom_call.1} parent=5 // pred_check
        %p217 = pneg %p216
      $region34: #{tpu_custom_call.1} parent=5 // pred_check_branch
        %219 = sbr.rel (%p217) target = $region36
      $region35: #{tpu_custom_call.1} parent=5 // pred_region
        // Predicated region
        $region37: #{tpu_custom_call.1} parent=35 // pred_check
          %p220 = pneg %p39
        $region38: #{tpu_custom_call.1} parent=35 // pred_check_branch
          %222 = sbr.rel (%p220) target = $region40
        $region39: #{tpu_custom_call.1} parent=35 // pred_region
          %s223 = sand.u32 %s29, 1
          %s224 = scalar_lea.sflag [#allocation3], %s223
          %s225 = sand.u32 %s29, 1
          %s226 = smul.addr %s225, 8
          %s227 = scalar_lea.vmem [#allocation2], %s226
          %s229 = ssub.s32 128, 128
          %230 = vsyncadd %s224, %s229
          %s231 = smul.addr %s19, 2
          %s232 = smul.addr %s231, 64
          %s233 = scalar_lea.hbm %s0, %s232
          %s235 = sshll.u32 %s227, 4
          %s236 = int_to_ptr.vmem [resolvable:$true] %s235
          %238 = dma.hbm_to_vmem [thread:$0]  %s233, 128, %s236, %s224
        $region40: #{tpu_custom_call.1} parent=35 // pred_fallthru
          _
      $region36: #{tpu_custom_call.1} parent=5 // pred_fallthru
        _
      %p239 = scmp.le.s32.totalorder 1, %s19
      %p240 = scmp.lt.s32.totalorder %s19, 3
      %p241 = pnand %p239, %p240
      %p242 = pneg %p241
      // Predicated region
      $region41: #{tpu_custom_call.1} parent=5 // pred_check
        _
      $region42: #{tpu_custom_call.1} parent=5 // pred_check_branch
        %244 = sbr.rel (%p241) target = $region44
      $region43: #{tpu_custom_call.1} parent=5 // pred_region
        %s245 = ssub.s32 %s19, 1
        %s246 = sand.u32 %s32, 1
        %s247 = scalar_lea.sflag [#allocation3], %s246
        %s248 = sand.u32 %s32, 1
        %s249 = smul.addr %s248, 8
        %s250 = scalar_lea.vmem [#allocation2], %s249
        // Predicated region
        $region45: #{tpu_custom_call.1} parent=43 // pred_check
          %p251 = pneg %p45
        $region46: #{tpu_custom_call.1} parent=43 // pred_check_branch
          %253 = sbr.rel (%p251) target = $region48
        $region47: #{tpu_custom_call.1} parent=43 // pred_region
          %254 = dma.done %s247, 128
        $region48: #{tpu_custom_call.1} parent=43 // pred_fallthru
          _
        // Predicated region
        $region49: #{tpu_custom_call.1} parent=43 // pred_check
          %p255 = pneg %p150
        $region50: #{tpu_custom_call.1} parent=43 // pred_check_branch
          %257 = sbr.rel (%p255) target = $region52
        $region51: #{tpu_custom_call.1} parent=43 // pred_region
          %258 = dma.done [#allocation6], 512
        $region52: #{tpu_custom_call.1} parent=43 // pred_fallthru
          _
        %s259 = sand.u32 %s32, 1
        %s260 = scalar_lea.sflag [#allocation3], %s259
        %s261 = sand.u32 %s32, 1
        %s262 = smul.addr %s261, 8
        %s263 = scalar_lea.vmem [#allocation2], %s262
        %p264 = pneg %p45
        %p265 = pneg %p42
        %p266 = pneg %p66
        %p267 = pneg %p63
        %p268 = pneg %p87
        %p269 = pneg %p84
        %p270 = pneg %p108
        %p271 = pneg %p105
        %p272 = pneg %p129
        %p273 = pneg %p126
        %p274 = pneg %p150
        %p275 = pneg %p147
        %p276 = pneg %p176
        %p277 = pneg %p173
        %s278 = sand.u32 %s163, 1
        %s279 = scalar_lea.sflag [#allocation4], %s278
        %s280 = sand.u32 %s163, 1
        %s281 = smul.addr %s280, 8
        %s282 = scalar_lea.vmem [#allocation7], %s281
        %v283 = vld [vmem:[%s250] sm:$0xff]
        %v284 = vld [vmem:[#allocation5] sm:$0xff]
        %v285 = vld [vmem:[#allocation5 + $0x8] sm:$0xff]
        %v286 = vld [vmem:[#allocation5 + $0x10] sm:$0x1]
        %v287 = vld [vmem:[#allocation5 + $0x18] sm:$0x1]
        %v289 = vcombine.high %v283, %v283
        %291 = vrot.lane.b32.xlu0 %v283, 17
        %v292 = vpop.permute.xlu0 %291
        %293 = vrot.lane.b32.xlu0 %v289, 17
        %v294 = vpop.permute.xlu0 %293
        %v295 = vlaneseq
        %v296 = vand.u32 %v295, 127
        %vm297 = vcmp.lt.s32.totalorder %v296, 17
        %v298 = vsel %vm297, %v292, %v294
        %v299 = vsel %vm297, %v294, %v292
        %v300 = vlaneseq
        %v301 = vshrl.u32 %v300, 7
        %v302 = vsub.s32 0, %v301
        %v303 = vrot.slane %v284, %v302
        %v304 = vlaneseq
        %v305 = vshrl.u32 %v304, 7
        %v306 = vsub.s32 0, %v305
        %v307 = vrot.slane %v285, %v306
        %v308 = vmul.f32 %v299, %v303
        %v309 = vmul.f32 %v298, %v307
        %310 = vrot.lane.b32.xlu0 %v283, 16
        %v311 = vpop.permute.xlu0 %310
        %312 = vrot.lane.b32.xlu0 %v289, 16
        %v313 = vpop.permute.xlu0 %312
        %vm314 = vcmp.lt.s32.totalorder %v296, 16
        %v315 = vsel %vm314, %v311, %v313
        %v316 = vsel %vm314, %v313, %v311
        %v317 = vlaneseq
        %v318 = vshrl.u32 %v317, 7
        %v319 = vsub.s32 1, %v318
        %v320 = vrot.slane %v284, %v319
        %v321 = vlaneseq
        %v322 = vshrl.u32 %v321, 7
        %v323 = vsub.s32 1, %v322
        %v324 = vrot.slane %v285, %v323
        %v325 = vmul.f32 %v316, %v320
        %v326 = vmul.f32 %v315, %v324
        %327 = vrot.lane.b32.xlu0 %v283, 15
        %v328 = vpop.permute.xlu0 %327
        %329 = vrot.lane.b32.xlu0 %v289, 15
        %v330 = vpop.permute.xlu0 %329
        %vm331 = vcmp.lt.s32.totalorder %v296, 15
        %v332 = vsel %vm331, %v328, %v330
        %v333 = vsel %vm331, %v330, %v328
        %v334 = vlaneseq
        %v335 = vshrl.u32 %v334, 7
        %v336 = vsub.s32 2, %v335
        %v337 = vrot.slane %v284, %v336
        %v338 = vlaneseq
        %v339 = vshrl.u32 %v338, 7
        %v340 = vsub.s32 2, %v339
        %v341 = vrot.slane %v285, %v340
        %v342 = vmul.f32 %v333, %v337
        %v343 = vmul.f32 %v332, %v341
        %344 = vrot.lane.b32.xlu0 %v283, 1
        %v345 = vpop.permute.xlu0 %344
        %346 = vrot.lane.b32.xlu0 %v289, 1
        %v347 = vpop.permute.xlu0 %346
        %vm348 = vcmp.lt.s32.totalorder %v296, 1
        %v349 = vsel %vm348, %v345, %v347
        %v350 = vsel %vm348, %v347, %v345
        %v351 = vlaneseq
        %v352 = vshrl.u32 %v351, 7
        %v353 = vsub.s32 3, %v352
        %v354 = vrot.slane %v284, %v353
        %v355 = vlaneseq
        %v356 = vshrl.u32 %v355, 7
        %v357 = vsub.s32 3, %v356
        %v358 = vrot.slane %v285, %v357
        %v359 = vmul.f32 %v350, %v354
        %v360 = vmul.f32 %v349, %v358
        %361 = vrot.lane.b32.xlu0 %v283, 127
        %v362 = vpop.permute.xlu0 %361
        %363 = vrot.lane.b32.xlu0 %v289, 127
        %v364 = vpop.permute.xlu0 %363
        %vm365 = vcmp.lt.s32.totalorder %v296, 127
        %v366 = vsel %vm365, %v362, %v364
        %v367 = vsel %vm365, %v364, %v362
        %v368 = vlaneseq
        %v369 = vshrl.u32 %v368, 7
        %v370 = vsub.s32 5, %v369
        %v371 = vrot.slane %v284, %v370
        %v372 = vlaneseq
        %v373 = vshrl.u32 %v372, 7
        %v374 = vsub.s32 5, %v373
        %v375 = vrot.slane %v285, %v374
        %v376 = vmul.f32 %v366, %v371
        %v377 = vmul.f32 %v367, %v375
        %378 = vrot.lane.b32.xlu0 %v283, 113
        %v379 = vpop.permute.xlu0 %378
        %380 = vrot.lane.b32.xlu0 %v289, 113
        %v381 = vpop.permute.xlu0 %380
        %vm382 = vcmp.lt.s32.totalorder %v296, 113
        %v383 = vsel %vm382, %v379, %v381
        %v384 = vsel %vm382, %v381, %v379
        %v385 = vlaneseq
        %v386 = vshrl.u32 %v385, 7
        %v387 = vsub.s32 6, %v386
        %v388 = vrot.slane %v284, %v387
        %v389 = vlaneseq
        %v390 = vshrl.u32 %v389, 7
        %v391 = vsub.s32 6, %v390
        %v392 = vrot.slane %v285, %v391
        %v393 = vmul.f32 %v383, %v388
        %v394 = vmul.f32 %v384, %v392
        %395 = vrot.lane.b32.xlu0 %v283, 112
        %v396 = vpop.permute.xlu0 %395
        %397 = vrot.lane.b32.xlu0 %v289, 112
        %v398 = vpop.permute.xlu0 %397
        %vm399 = vcmp.lt.s32.totalorder %v296, 112
        %v400 = vsel %vm399, %v396, %v398
        %v401 = vsel %vm399, %v398, %v396
        %v402 = vlaneseq
        %v403 = vshrl.u32 %v402, 7
        %v404 = vsub.s32 7, %v403
        %v405 = vrot.slane %v284, %v404
        %v406 = vlaneseq
        %v407 = vshrl.u32 %v406, 7
        %v408 = vsub.s32 7, %v407
        %v409 = vrot.slane %v285, %v408
        %v410 = vmul.f32 %v400, %v405
        %v411 = vmul.f32 %v401, %v409
        %412 = vrot.lane.b32.xlu0 %v283, 111
        %v413 = vpop.permute.xlu0 %412
        %414 = vrot.lane.b32.xlu0 %v289, 111
        %v415 = vpop.permute.xlu0 %414
        %vm416 = vcmp.lt.s32.totalorder %v296, 111
        %v417 = vsel %vm416, %v413, %v415
        %v418 = vsel %vm416, %v415, %v413
        %v419 = vlaneseq
        %v420 = vshrl.u32 %v419, 7
        %v421 = vsub.s32 0, %v420
        %v422 = vrot.slane %v286, %v421
        %v423 = vlaneseq
        %v424 = vshrl.u32 %v423, 7
        %v425 = vsub.s32 0, %v424
        %v426 = vrot.slane %v287, %v425
        %v427 = vmul.f32 %v417, %v422
        %v428 = vmul.f32 %v418, %v426
        %v431 = vrot.slane %v325, 4
        %v432 = vrot.slane %v326, 4
        %v437 = vrot.slane %v359, 4
        %v438 = vrot.slane %v360, 4
        %v443 = vrot.slane %v376, 4
        %v444 = vrot.slane %v377, 4
        %v449 = vrot.slane %v410, 4
        %v450 = vrot.slane %v411, 4
        %vm453 = vcmask 1043456
        %v454 = vsel %vm453, %v308, %v431
        %v455 = vsel %vm453, %v309, %v432
        %v456 = vsel %vm453, %v342, %v437
        %v457 = vsel %vm453, %v343, %v438
        %v458 = vsel %vm453, %v283, %v443
        %v459 = vsel %vm453, %v289, %v444
        %v460 = vsel %vm453, %v393, %v449
        %v461 = vsel %vm453, %v394, %v450
        %v462 = vld [vmem:[%s1] sm:$0xff]
        %v463 = vld [vmem:[%s2] sm:$0xff]
        %465 = vset.pattern.permute.xlu0 0
        %466 = vperm.xlu0 %465, %v463
        %v467 = vpop.permute.xlu0 %466
        %vm469 = vcmask 293888
        %v471 = vsel %vm469, %v462, 0
        %v474 = vsel %vm453, %v427, 0
        %v477 = vsel %vm453, %v428, 0
        %479 = vmatprep.subr.mxu0 0.0
        %480 = vmatpush1.msra.mxu0 0.0
        %481 = vmatprep.subr.mxu0 0.0
        %482 = vmatpush1.msra.mxu0 0.0
        %483 = vmatprep.subr.mxu0 0.0
        %484 = vmatpush1.msra.mxu0 0.0
        %485 = vmatprep.subr.mxu0 0.0
        %486 = vmatpush1.msra.mxu0 0.0
        %487 = vmatprep.subr.mxu0 0.0
        %488 = vmatpush1.msra.mxu0 0.0
        %489 = vmatprep.subr.mxu0 0.0
        %490 = vmatpush1.msra.mxu0 0.0
        %491 = vmatprep.subr.mxu0 0.0
        %492 = vmatpush1.msra.mxu0 0.0
        %493 = vmatprep.subr.mxu0 0.0
        %494 = vmatpush1.msra.mxu0 0.0
        %495 = vmatprep.subr.mxu0 0.0
        %496 = vmatpush1.msra.mxu0 0.0
        %497 = vmatprep.subr.mxu0 0.0
        %498 = vmatpush1.msra.mxu0 0.0
        %499 = vmatprep.subr.mxu0 0.0
        %500 = vmatpush1.msra.mxu0 0.0
        %501 = vmatprep.subr.mxu0 %v477
        %502 = vmatpush1.msra.mxu0 %v474
        %503 = vmatprep.subr.mxu0 %v461
        %504 = vmatpush1.msra.mxu0 %v460
        %505 = vmatprep.subr.mxu0 %v459
        %506 = vmatpush1.msra.mxu0 %v458
        %507 = vmatprep.subr.mxu0 %v457
        %508 = vmatpush1.msra.mxu0 %v456
        %509 = vmatprep.subr.mxu0 %v455
        %510 = vmatpush1.msra.mxu0 %v454
        %511 = vmatprep.subr.mxu0 0.0
        %512 = vmatpush2.msra.mxu0 0.0
        %513 = vmatprep.subr.mxu0 0.0
        %514 = vmatpush2.msra.mxu0 0.0
        %515 = vmatprep.subr.mxu0 0.0
        %516 = vmatpush2.msra.mxu0 0.0
        %517 = vmatprep.subr.mxu0 0.0
        %518 = vmatpush2.msra.mxu0 0.0
        %519 = vmatprep.subr.mxu0 0.0
        %520 = vmatpush2.msra.mxu0 0.0
        %521 = vmatprep.subr.mxu0 0.0
        %522 = vmatpush2.msra.mxu0 0.0
        %523 = vmatprep.subr.mxu0 0.0
        %524 = vmatpush2.msra.mxu0 0.0
        %525 = vmatprep.subr.mxu0 0.0
        %526 = vmatpush2.msra.mxu0 0.0
        %527 = vmatprep.subr.mxu0 0.0
        %528 = vmatpush2.msra.mxu0 0.0
        %529 = vmatprep.subr.mxu0 0.0
        %530 = vmatpush2.msra.mxu0 0.0
        %531 = vmatprep.subr.mxu0 0.0
        %532 = vmatpush2.msra.mxu0 0.0
        %533 = vmatprep.subr.mxu0 0.0
        %534 = vmatpush2.msra.mxu0 0.0
        %535 = vmatprep.subr.mxu0 0.0
        %536 = vmatpush2.msra.mxu0 0.0
        %537 = vmatprep.subr.mxu0 0.0
        %538 = vmatpush2.msra.mxu0 0.0
        %539 = vmatprep.subr.mxu0 0.0
        %540 = vmatpush2.msra.mxu0 0.0
        %541 = vmatprep.subr.mxu0 0.0
        %542 = vmatpush2.msra.mxu0 0.0
        %543 = vmatprep.mubr.f32.mxu0 0.0
        %544 = vmatmul.mubr.f32.gmra.mxu0 %v471
        %v545 = vpop.f32.mrf.mxu0
        %v546 = vadd.f32 %v467, %v545
        %v547 = vpop.f32.mrf.mxu0
        %v548 = vadd.f32 %v467, %v547
        %549 = vdwg.mxu0
        %v550 = vmax.f32 %v546, 0.0
        %v551 = vmax.f32 %v548, 0.0
        %552 = vrot.lane.b32.xlu0 %v550, 17
        %v553 = vpop.permute.xlu0 %552
        %554 = vrot.lane.b32.xlu0 %v551, 17
        %v555 = vpop.permute.xlu0 %554
        %v556 = vsel %vm297, %v553, %v555
        %v557 = vsel %vm297, %v555, %v553
        %v558 = vmul.f32 %v557, %v303
        %v559 = vmul.f32 %v556, %v307
        %560 = vrot.lane.b32.xlu0 %v550, 16
        %v561 = vpop.permute.xlu0 %560
        %562 = vrot.lane.b32.xlu0 %v551, 16
        %v563 = vpop.permute.xlu0 %562
        %v564 = vsel %vm314, %v561, %v563
        %v565 = vsel %vm314, %v563, %v561
        %v566 = vmul.f32 %v565, %v320
        %v567 = vmul.f32 %v564, %v324
        %568 = vrot.lane.b32.xlu0 %v550, 15
        %v569 = vpop.permute.xlu0 %568
        %570 = vrot.lane.b32.xlu0 %v551, 15
        %v571 = vpop.permute.xlu0 %570
        %v572 = vsel %vm331, %v569, %v571
        %v573 = vsel %vm331, %v571, %v569
        %v574 = vmul.f32 %v573, %v337
        %v575 = vmul.f32 %v572, %v341
        %576 = vrot.lane.b32.xlu0 %v550, 1
        %v577 = vpop.permute.xlu0 %576
        %578 = vrot.lane.b32.xlu0 %v551, 1
        %v579 = vpop.permute.xlu0 %578
        %v580 = vsel %vm348, %v577, %v579
        %v581 = vsel %vm348, %v579, %v577
        %v582 = vmul.f32 %v581, %v354
        %v583 = vmul.f32 %v580, %v358
        %584 = vrot.lane.b32.xlu0 %v550, 127
        %v585 = vpop.permute.xlu0 %584
        %586 = vrot.lane.b32.xlu0 %v551, 127
        %v587 = vpop.permute.xlu0 %586
        %v588 = vsel %vm365, %v585, %v587
        %v589 = vsel %vm365, %v587, %v585
        %v590 = vmul.f32 %v588, %v371
        %v591 = vmul.f32 %v589, %v375
        %592 = vrot.lane.b32.xlu0 %v550, 113
        %v593 = vpop.permute.xlu0 %592
        %594 = vrot.lane.b32.xlu0 %v551, 113
        %v595 = vpop.permute.xlu0 %594
        %v596 = vsel %vm382, %v593, %v595
        %v597 = vsel %vm382, %v595, %v593
        %v598 = vmul.f32 %v596, %v388
        %v599 = vmul.f32 %v597, %v392
        %600 = vrot.lane.b32.xlu0 %v550, 112
        %v601 = vpop.permute.xlu0 %600
        %602 = vrot.lane.b32.xlu0 %v551, 112
        %v603 = vpop.permute.xlu0 %602
        %v604 = vsel %vm399, %v601, %v603
        %v605 = vsel %vm399, %v603, %v601
        %v606 = vmul.f32 %v604, %v405
        %v607 = vmul.f32 %v605, %v409
        %608 = vrot.lane.b32.xlu0 %v550, 111
        %v609 = vpop.permute.xlu0 %608
        %610 = vrot.lane.b32.xlu0 %v551, 111
        %v611 = vpop.permute.xlu0 %610
        %v612 = vsel %vm416, %v609, %v611
        %v613 = vsel %vm416, %v611, %v609
        %v614 = vmul.f32 %v612, %v422
        %v615 = vmul.f32 %v613, %v426
        %v616 = vld [vmem:[%s3] sm:$0xf]
        %v617 = vld [vmem:[%s4] sm:$0xf]
        %619 = vset.pattern.permute.xlu0 0
        %620 = vperm.xlu0 %619, %v617
        %v621 = vpop.permute.xlu0 %620
        %vm623 = vcmask 588800
        %v625 = vsel %vm623, %v616, 0
        %627 = vmatprep.subr.mxu0 0.0
        %628 = vmatpush1.msra.mxu0 0.0
        %629 = vmatprep.subr.mxu0 0.0
        %630 = vmatpush1.msra.mxu0 0.0
        %631 = vmatprep.subr.mxu0 0.0
        %632 = vmatpush1.msra.mxu0 0.0
        %633 = vmatprep.subr.mxu0 0.0
        %634 = vmatpush1.msra.mxu0 0.0
        %635 = vmatprep.subr.mxu0 0.0
        %636 = vmatpush1.msra.mxu0 0.0
        %637 = vmatprep.subr.mxu0 0.0
        %638 = vmatpush1.msra.mxu0 0.0
        %639 = vmatprep.subr.mxu0 0.0
        %640 = vmatpush1.msra.mxu0 0.0
        %641 = vmatprep.subr.mxu0 %v615
        %642 = vmatpush1.msra.mxu0 %v614
        %643 = vmatprep.subr.mxu0 %v607
        %644 = vmatpush1.msra.mxu0 %v606
        %645 = vmatprep.subr.mxu0 %v599
        %646 = vmatpush1.msra.mxu0 %v598
        %647 = vmatprep.subr.mxu0 %v591
        %648 = vmatpush1.msra.mxu0 %v590
        %649 = vmatprep.subr.mxu0 %v551
        %650 = vmatpush1.msra.mxu0 %v550
        %651 = vmatprep.subr.mxu0 %v583
        %652 = vmatpush1.msra.mxu0 %v582
        %653 = vmatprep.subr.mxu0 %v575
        %654 = vmatpush1.msra.mxu0 %v574
        %655 = vmatprep.subr.mxu0 %v567
        %656 = vmatpush1.msra.mxu0 %v566
        %657 = vmatprep.subr.mxu0 %v559
        %658 = vmatpush1.msra.mxu0 %v558
        %659 = vmatprep.subr.mxu0 0.0
        %660 = vmatpush2.msra.mxu0 0.0
        %661 = vmatprep.subr.mxu0 0.0
        %662 = vmatpush2.msra.mxu0 0.0
        %663 = vmatprep.subr.mxu0 0.0
        %664 = vmatpush2.msra.mxu0 0.0
        %665 = vmatprep.subr.mxu0 0.0
        %666 = vmatpush2.msra.mxu0 0.0
        %667 = vmatprep.subr.mxu0 0.0
        %668 = vmatpush2.msra.mxu0 0.0
        %669 = vmatprep.subr.mxu0 0.0
        %670 = vmatpush2.msra.mxu0 0.0
        %671 = vmatprep.subr.mxu0 0.0
        %672 = vmatpush2.msra.mxu0 0.0
        %673 = vmatprep.subr.mxu0 0.0
        %674 = vmatpush2.msra.mxu0 0.0
        %675 = vmatprep.subr.mxu0 0.0
        %676 = vmatpush2.msra.mxu0 0.0
        %677 = vmatprep.subr.mxu0 0.0
        %678 = vmatpush2.msra.mxu0 0.0
        %679 = vmatprep.subr.mxu0 0.0
        %680 = vmatpush2.msra.mxu0 0.0
        %681 = vmatprep.subr.mxu0 0.0
        %682 = vmatpush2.msra.mxu0 0.0
        %683 = vmatprep.subr.mxu0 0.0
        %684 = vmatpush2.msra.mxu0 0.0
        %685 = vmatprep.subr.mxu0 0.0
        %686 = vmatpush2.msra.mxu0 0.0
        %687 = vmatprep.subr.mxu0 0.0
        %688 = vmatpush2.msra.mxu0 0.0
        %689 = vmatprep.subr.mxu0 0.0
        %690 = vmatpush2.msra.mxu0 0.0
        %691 = vmatprep.mubr.f32.mxu0 0.0
        %692 = vmatmul.mubr.f32.gmra.mxu0 %v625
        %v693 = vpop.f32.mrf.mxu0
        %v694 = vadd.f32 %v621, %v693
        %v695 = vpop.f32.mrf.mxu0
        %v696 = vadd.f32 %v621, %v695
        %697 = vdwg.mxu0
        %v700 = vcombine.low %v694, %v696
        %v702 = vadd.f32 %v283, %v700
        %703 = vst [vmem:[%s282] sm:$0xff] %v702
        %s704 = sand.u32 %s163, 1
        %s705 = scalar_lea.sflag [#allocation4], %s704
        %s706 = sand.u32 %s163, 1
        %s707 = smul.addr %s706, 8
        %s708 = scalar_lea.vmem [#allocation7], %s707
        // Predicated region
        $region53: #{tpu_custom_call.1} parent=43 // pred_check
          %p709 = pneg %p173
        $region54: #{tpu_custom_call.1} parent=43 // pred_check_branch
          %711 = sbr.rel (%p709) target = $region56
        $region55: #{tpu_custom_call.1} parent=43 // pred_region
          %s713 = ssub.s32 128, 128
          %714 = vsyncadd %s705, %s713
          %s715 = smul.addr %s24, 2
          %s716 = smul.addr %s715, 64
          %s717 = scalar_lea.hbm %s6, %s716
          %s719 = sshll.u32 %s708, 4
          %s720 = int_to_ptr.vmem [resolvable:$true] %s719
          %722 = dma.vmem_to_hbm [thread:$0]  %s720, 128, %s717, %s705
        $region56: #{tpu_custom_call.1} parent=43 // pred_fallthru
          _
      $region44: #{tpu_custom_call.1} parent=5 // pred_fallthru
        _
      %p723 = scmp.le.s32.totalorder 2, %s19
      // Predicated region
      $region57: #{tpu_custom_call.1} parent=5 // pred_check
        %p724 = pneg %p723
      $region58: #{tpu_custom_call.1} parent=5 // pred_check_branch
        %726 = sbr.rel (%p724) target = $region60
      $region59: #{tpu_custom_call.1} parent=5 // pred_region
        %s727 = ssub.s32 %s19, 2
        // Predicated region
        $region61: #{tpu_custom_call.1} parent=59 // pred_check
          %p728 = pneg %p179
        $region62: #{tpu_custom_call.1} parent=59 // pred_check_branch
          %730 = sbr.rel (%p728) target = $region64
        $region63: #{tpu_custom_call.1} parent=59 // pred_region
          %s731 = sand.u32 %s164, 1
          %s732 = scalar_lea.sflag [#allocation4], %s731
          %s733 = sand.u32 %s164, 1
          %s734 = smul.addr %s733, 8
          %s735 = scalar_lea.vmem [#allocation7], %s734
          %736 = dma.done %s732, 128
        $region64: #{tpu_custom_call.1} parent=59 // pred_fallthru
          _
      $region60: #{tpu_custom_call.1} parent=5 // pred_fallthru
        _
    $region6: #{tpu_custom_call.1} parent=1 // loop_footer
      %s23 = sadd.s32 1, %s19
    $region7: #{tpu_custom_call.1} parent=1 // loop_footer_branch
      %18 = sbr.rel target = $region3
    $region8: #{tpu_custom_call.1} parent=1 // loop_exit
      _
    %737 = vsyncpa [#allocation3], 1
    %s738 = scalar_lea.sflag [#allocation3], 1
    %739 = vsyncpa %s738, 1
    %740 = vsyncpa [#allocation6], 1
    %741 = vsyncpa [#allocation4], 1
    %s742 = scalar_lea.sflag [#allocation4], 1
    %743 = vsyncpa %s742, 1

</llo_original>
